<compile_context>
chip_gen: v7x
topology: tpu7x:2x2x1
jax: 0.10.0
libtpu: 0.0.40
codegen_flags: <defaults>
</compile_context>

<pallas_src>
import jax
import jax.numpy as jnp
from jax.experimental import pallas as pl
from jax.experimental.pallas import tpu as pltpu


def _mask_combine_kernel(fwd_ref, bwd_ref, sem_ref, out_ref):
    """((fwd > 0) | (bwd > 0) | (sem > 0)) — one lane-dense 2D tile per step."""
    pred = (fwd_ref[...] > 0) | (bwd_ref[...] > 0) | (sem_ref[...] > 0)
    out_ref[...] = pred.astype(out_ref.dtype)


_MAX_LANE_COLS = 2048          # cap on the lane-dense last dim (multiple of 128)
_MIN_LANE_COLS = 128
_TARGET_TILE_BYTES = 2 << 20   # ~2 MiB per array per tile (measured ~85% of roofline)
_VMEM_LIMIT_BYTES = 32 << 20   # > v5e 16 MiB default, < v7x 64 MiB physical


def _pick_lane_cols(total):
    """Largest multiple of 128 (<= cap) that divides `total`; pad only as last resort."""
    for cols in range(_MAX_LANE_COLS, _MIN_LANE_COLS - 1, -128):
        if total % cols == 0:
            return cols, False
    return 1024, True


def _pick_tile_rows(n_rows, n_cols, itemsize):
    """Tile rows: ~2 MiB per array, multiple of 8 (or full extent), >=2 grid steps
    whenever legal so the parallel axis spans both v7x TensorCores."""
    target = max(8, (_TARGET_TILE_BYTES // (n_cols * itemsize)) // 8 * 8)
    if n_rows <= target:
        if n_rows > 8:
            # Split into (at least) two blocks for megacore; keep multiple of 8.
            half = ((n_rows + 1) // 2 + 7) // 8 * 8
            return half
        return n_rows        # full-extent block (legal even if < 8)
    return target


def mois_sam2_mask_combine(fwd_logits, bwd_logits, sem_logits,
                           out_dtype=jnp.float32):
    """Combine SAM2 mask logits into the final binary prediction volume.

    Args:
      fwd_logits:  (H, W, D) float — forward-propagation mask logits.
      bwd_logits:  (H, W, D) float — backward-propagation mask logits.
      sem_logits:  (H, W, D) float — exemplar semantic mask logits.
      out_dtype:   dtype of the returned mask (f32 matches torch.Tensor()).

    Returns:
      (1, 1, H, W, D) binary prediction, matching the PyTorch
      `torch.Tensor(output).unsqueeze(0).unsqueeze(0)` return.
    """
    H, W, D = fwd_logits.shape
    total = H * W * D
    in_itemsize = jnp.dtype(fwd_logits.dtype).itemsize

    n_cols, needs_pad = _pick_lane_cols(total)

    if not needs_pad:
        n_rows = total // n_cols

        def _to_slab(x):
            return x.reshape(n_rows, n_cols)       # free reshape, no HBM copy
    else:
        # Last-resort path (volume size not a multiple of 128): one flat pad.
        n_rows = pl.cdiv(total, n_cols)
        padded_total = n_rows * n_cols

        def _to_slab(x):
            x = x.reshape(-1)
            x = jnp.pad(x, (0, padded_total - total))
            return x.reshape(n_rows, n_cols)

    tile_rows = _pick_tile_rows(n_rows, n_cols, in_itemsize)
    grid = (pl.cdiv(n_rows, tile_rows),)           # ragged last block handled by Pallas

    spec = pl.BlockSpec((tile_rows, n_cols), lambda i: (i, 0))

    cost = pl.CostEstimate(
        flops=3 * total,
        transcendentals=0,
        bytes_accessed=3 * total * in_itemsize + total * jnp.dtype(out_dtype).itemsize,
    )

    out2 = pl.pallas_call(
        _mask_combine_kernel,
        out_shape=jax.ShapeDtypeStruct((n_rows, n_cols), out_dtype),
        grid=grid,
        in_specs=[spec, spec, spec],
        out_specs=spec,
        compiler_params=pltpu.CompilerParams(
            dimension_semantics=("parallel",),
            vmem_limit_bytes=_VMEM_LIMIT_BYTES,
        ),
        cost_estimate=cost,
    )(_to_slab(fwd_logits), _to_slab(bwd_logits), _to_slab(sem_logits))

    if needs_pad:
        prediction = out2.reshape(-1)[:total].reshape(H, W, D)
    else:
        prediction = out2.reshape(H, W, D)
    return prediction[None, None, :, :, :]


def _reference(fwd, bwd, sem):
    """Pure-JAX reference matching the PyTorch math exactly."""
    pred = jnp.logical_or(fwd > 0.0, bwd > 0.0)
    pred = jnp.maximum(pred.astype(jnp.float32), (sem > 0.0).astype(jnp.float32))
    return pred[None, None, :, :, :]


if __name__ == "__main__":
    # Small, deterministic example inputs consistent with the forward pass: a
    # 3-D volume (H, W, D) of per-slice mask logits from the SAM2 predictor.
    H, W, D = 64, 64, 16   # total = 65536 → lane-dense slab with zero padding

    key = jax.random.PRNGKey(0)
    k_fwd, k_bwd, k_sem = jax.random.split(key, 3)
    fwd_logits = jax.random.normal(k_fwd, (H, W, D), dtype=jnp.float32)
    bwd_logits = jax.random.normal(k_bwd, (H, W, D), dtype=jnp.float32)
    sem_logits = jax.random.normal(k_sem, (H, W, D), dtype=jnp.float32)

    combine = jax.jit(mois_sam2_mask_combine)

    out = jax.block_until_ready(combine(fwd_logits, bwd_logits, sem_logits))
    ref = _reference(fwd_logits, bwd_logits, sem_logits)

    assert out.shape == (1, 1, H, W, D), out.shape
    assert out.dtype == jnp.float32
    assert bool(jnp.all(out == ref))

    # Also exercise the reduced-read-traffic path (bf16 logits).
    out_bf16 = jax.block_until_ready(
        combine(fwd_logits.astype(jnp.bfloat16),
                bwd_logits.astype(jnp.bfloat16),
                sem_logits.astype(jnp.bfloat16)))
    ref_bf16 = _reference(fwd_logits.astype(jnp.bfloat16),
                          bwd_logits.astype(jnp.bfloat16),
                          sem_logits.astype(jnp.bfloat16))
    assert bool(jnp.all(out_bf16 == ref_bf16))

    print("KERNEL_OK")
</pallas_src>

<mosaic_0001>
module attributes {stable_mosaic.version = 11 : i64} {
  func.func @_mask_combine_kernel(%arg0: i32, %arg1: memref<16x2048xf32, #tpu.memory_space<vmem>>, %arg2: memref<16x2048xf32, #tpu.memory_space<vmem>>, %arg3: memref<16x2048xf32, #tpu.memory_space<vmem>>, %arg4: memref<16x2048xf32, #tpu.memory_space<vmem>>) attributes {dimension_semantics = [#tpu.dimension_semantics<parallel>], iteration_bounds = array<i64: 2>, scalar_prefetch = 0 : i64, scratch_operands = 0 : i64, tpu.core_type = #tpu.core_type<tc>, window_params = [{transform_indices = @transform_0, window_bounds = array<i64: 16, 2048>}, {transform_indices = @transform_1, window_bounds = array<i64: 16, 2048>}, {transform_indices = @transform_2, window_bounds = array<i64: 16, 2048>}, {transform_indices = @transform_3, window_bounds = array<i64: 16, 2048>}]} {
    %c0 = arith.constant 0 : index
    %c0_0 = arith.constant 0 : index
    %0 = vector.load %arg1[%c0, %c0_0] : memref<16x2048xf32, #tpu.memory_space<vmem>>, vector<16x2048xf32>
    %cst = arith.constant 0.000000e+00 : f32
    %1 = vector.broadcast %cst : f32 to vector<16x2048xf32>
    %2 = arith.cmpf ogt, %0, %1 : vector<16x2048xf32>
    %c0_1 = arith.constant 0 : index
    %c0_2 = arith.constant 0 : index
    %3 = vector.load %arg2[%c0_1, %c0_2] : memref<16x2048xf32, #tpu.memory_space<vmem>>, vector<16x2048xf32>
    %cst_3 = arith.constant 0.000000e+00 : f32
    %4 = vector.broadcast %cst_3 : f32 to vector<16x2048xf32>
    %5 = arith.cmpf ogt, %3, %4 : vector<16x2048xf32>
    %6 = arith.ori %2, %5 : vector<16x2048xi1>
    %c0_4 = arith.constant 0 : index
    %c0_5 = arith.constant 0 : index
    %7 = vector.load %arg3[%c0_4, %c0_5] : memref<16x2048xf32, #tpu.memory_space<vmem>>, vector<16x2048xf32>
    %cst_6 = arith.constant 0.000000e+00 : f32
    %8 = vector.broadcast %cst_6 : f32 to vector<16x2048xf32>
    %9 = arith.cmpf ogt, %7, %8 : vector<16x2048xf32>
    %10 = arith.ori %6, %9 : vector<16x2048xi1>
    %11 = arith.extui %10 : vector<16x2048xi1> to vector<16x2048xi32>
    %12 = arith.sitofp %11 : vector<16x2048xi32> to vector<16x2048xf32>
    %c0_7 = arith.constant 0 : index
    %c0_8 = arith.constant 0 : index
    %13 = vector.load %arg4[%c0_7, %c0_8] : memref<16x2048xf32, #tpu.memory_space<vmem>>, vector<16x2048xf32>
    tpu.vector_store %arg4[%c0_7, %c0_8], %12 {strides = array<i32>} : memref<16x2048xf32, #tpu.memory_space<vmem>>, vector<16x2048xf32>,
    return
  }
  func.func @transform_0(%arg0: i32) -> (i32, i32) {
    %c0_i32 = arith.constant 0 : i32
    %c0_i32_0 = arith.constant 0 : i32
    return %arg0, %c0_i32 : i32, i32
  }
  func.func @transform_1(%arg0: i32) -> (i32, i32) {
    %c0_i32 = arith.constant 0 : i32
    %c0_i32_0 = arith.constant 0 : i32
    return %arg0, %c0_i32 : i32, i32
  }
  func.func @transform_2(%arg0: i32) -> (i32, i32) {
    %c0_i32 = arith.constant 0 : i32
    %c0_i32_0 = arith.constant 0 : i32
    return %arg0, %c0_i32 : i32, i32
  }
  func.func @transform_3(%arg0: i32) -> (i32, i32) {
    %c0_i32 = arith.constant 0 : i32
    %c0_i32_0 = arith.constant 0 : i32
    return %arg0, %c0_i32 : i32, i32
  }
}

</mosaic_0001>

<llo_original>
// kernel: mois_sam2_mask_combine.1
$region0: #{mois_sam2_mask_combine.1}
  #allocation0 [shape = 'u32[]', space=smem, size = 0x4, offset = 0x4, fixed_abs, tag = 'smem constant byte address 0x4 - core index']
  #allocation1 [shape = 'u32[144,128]{1,0:T(1,128)}', space=vmem, size = 0x12000, scoped, tag = 'internal scratch']
  %s0 = inlined_call_operand.vmem [shape: f32[32,2048], index: 0, kind: input, shape index: {}]
  %s1 = inlined_call_operand.vmem [shape: f32[32,2048], index: 1, kind: input, shape index: {}]
  %s2 = inlined_call_operand.vmem [shape: f32[32,2048], index: 2, kind: input, shape index: {}]
  %s3 = inlined_call_operand.vmem [shape: f32[32,2048], index: 3, kind: output, shape index: {}]
  %s4 = sld [smem:[#allocation0]]
  $region45: #{mois_sam2_mask_combine.1} parent=0
    _
  %s6 = ssub.s32 1, %s4
  %s7 = scalar_select 0, %s6, %s4
  loop: start=0, step=1, limit=4
  $region2: #{mois_sam2_mask_combine.1} parent=0 // loop_pre_header
    _
  $region3: #{mois_sam2_mask_combine.1} parent=0 // loop_header
    %s9 = sphi 0, %s13
    %p10 = scmp.ge.s32.totalorder %s9, 4
    %s19 = sphi 0, %s21
    %s22 = sphi 0, %s19
    %s23 = sphi 0, %s22
    %s39 = sphi 0, %s23
    %s45 = sphi 0, %s47
    %s48 = sphi 0, %s45
    %s49 = sphi 0, %s48
    %s65 = sphi 0, %s49
    %s71 = sphi 0, %s73
    %s74 = sphi 0, %s71
    %s75 = sphi 0, %s74
    %s91 = sphi 0, %s75
    %s97 = sphi 0, %s99
    %s100 = sphi 0, %s97
    %s101 = sphi 0, %s100
    %s117 = sphi 0, %s101
  $region4: #{mois_sam2_mask_combine.1} parent=0 // loop_header_branch
    %12 = sbr.rel (%p10) target = $region8
  $region5: #{mois_sam2_mask_combine.1} parent=0 // loop_body
    %s14 = ssub.s32 %s9, 1
    %s15 = ssub.s32 %s9, 2
    %s16 = sadd.s32 %s9, 1
    %s17 = ssub.s32 %s9, %s16
    %p18 = scmp.eq.s32.totalorder %s17, 0
    %s20 = sadd.s32 %s19, 1
    %s21 = scalar_select %p18, %s19, %s20
    %p24 = pneg %p18
    %p25 = scmp.eq.s32.totalorder %s9, 1
    %p26 = por %p24, %p25
    %p27 = scmp.ne.s32.totalorder %s19, %s22
    %p28 = scmp.eq.s32.totalorder %s9, 0
    %p29 = por %p27, %p28
    %p30 = scmp.ne.s32.totalorder %s19, %s22
    %p31 = scmp.eq.s32.totalorder %s14, 1
    %p32 = por %p30, %p31
    %p33 = scmp.ne.s32.totalorder %s22, %s23
    %p34 = scmp.eq.s32.totalorder %s14, 0
    %p35 = por %p33, %p34
    %p36 = scmp.ne.s32.totalorder %s22, %s23
    %p37 = scmp.eq.s32.totalorder %s15, 1
    %p38 = por %p36, %p37
    %p40 = scmp.ne.s32.totalorder %s23, %s39
    %p41 = scmp.eq.s32.totalorder %s15, 0
    %p42 = por %p40, %p41
    %s43 = ssub.s32 %s9, %s16
    %p44 = scmp.eq.s32.totalorder %s43, 0
    %s46 = sadd.s32 %s45, 1
    %s47 = scalar_select %p44, %s45, %s46
    %p50 = pneg %p44
    %p51 = scmp.eq.s32.totalorder %s9, 1
    %p52 = por %p50, %p51
    %p53 = scmp.ne.s32.totalorder %s45, %s48
    %p54 = scmp.eq.s32.totalorder %s9, 0
    %p55 = por %p53, %p54
    %p56 = scmp.ne.s32.totalorder %s45, %s48
    %p57 = scmp.eq.s32.totalorder %s14, 1
    %p58 = por %p56, %p57
    %p59 = scmp.ne.s32.totalorder %s48, %s49
    %p60 = scmp.eq.s32.totalorder %s14, 0
    %p61 = por %p59, %p60
    %p62 = scmp.ne.s32.totalorder %s48, %s49
    %p63 = scmp.eq.s32.totalorder %s15, 1
    %p64 = por %p62, %p63
    %p66 = scmp.ne.s32.totalorder %s49, %s65
    %p67 = scmp.eq.s32.totalorder %s15, 0
    %p68 = por %p66, %p67
    %s69 = ssub.s32 %s9, %s16
    %p70 = scmp.eq.s32.totalorder %s69, 0
    %s72 = sadd.s32 %s71, 1
    %s73 = scalar_select %p70, %s71, %s72
    %p76 = pneg %p70
    %p77 = scmp.eq.s32.totalorder %s9, 1
    %p78 = por %p76, %p77
    %p79 = scmp.ne.s32.totalorder %s71, %s74
    %p80 = scmp.eq.s32.totalorder %s9, 0
    %p81 = por %p79, %p80
    %p82 = scmp.ne.s32.totalorder %s71, %s74
    %p83 = scmp.eq.s32.totalorder %s14, 1
    %p84 = por %p82, %p83
    %p85 = scmp.ne.s32.totalorder %s74, %s75
    %p86 = scmp.eq.s32.totalorder %s14, 0
    %p87 = por %p85, %p86
    %p88 = scmp.ne.s32.totalorder %s74, %s75
    %p89 = scmp.eq.s32.totalorder %s15, 1
    %p90 = por %p88, %p89
    %p92 = scmp.ne.s32.totalorder %s75, %s91
    %p93 = scmp.eq.s32.totalorder %s15, 0
    %p94 = por %p92, %p93
    %s95 = ssub.s32 %s9, %s16
    %p96 = scmp.eq.s32.totalorder %s95, 0
    %s98 = sadd.s32 %s97, 1
    %s99 = scalar_select %p96, %s97, %s98
    %p102 = pneg %p96
    %p103 = scmp.eq.s32.totalorder %s9, 1
    %p104 = por %p102, %p103
    %p105 = scmp.ne.s32.totalorder %s97, %s100
    %p106 = scmp.eq.s32.totalorder %s9, 0
    %p107 = por %p105, %p106
    %p108 = scmp.ne.s32.totalorder %s97, %s100
    %p109 = scmp.eq.s32.totalorder %s14, 1
    %p110 = por %p108, %p109
    %p111 = scmp.ne.s32.totalorder %s100, %s101
    %p112 = scmp.eq.s32.totalorder %s14, 0
    %p113 = por %p111, %p112
    %p114 = scmp.ne.s32.totalorder %s100, %s101
    %p115 = scmp.eq.s32.totalorder %s15, 1
    %p116 = por %p114, %p115
    %p118 = scmp.ne.s32.totalorder %s101, %s117
    %p119 = scmp.eq.s32.totalorder %s15, 0
    %p120 = por %p118, %p119
    %p121 = scmp.le.s32.totalorder 1, %s9
    %p122 = scmp.lt.s32.totalorder %s9, 3
    %p123 = pnand %p121, %p122
    %p124 = pneg %p123
    // Predicated region
    $region9: #{mois_sam2_mask_combine.1} parent=5 // pred_check
      _
    $region10: #{mois_sam2_mask_combine.1} parent=5 // pred_check_branch
      %126 = sbr.rel (%p123) target = $region12
    $region11: #{mois_sam2_mask_combine.1} parent=5 // pred_region
      %s127 = ssub.s32 %s9, 1
    $region12: #{mois_sam2_mask_combine.1} parent=5 // pred_fallthru
      _
    %p128 = scmp.lt.s32.totalorder %s9, 2
    // Predicated region
    $region13: #{mois_sam2_mask_combine.1} parent=5 // pred_check
      %p129 = pneg %p128
    $region14: #{mois_sam2_mask_combine.1} parent=5 // pred_check_branch
      %131 = sbr.rel (%p129) target = $region16
    $region15: #{mois_sam2_mask_combine.1} parent=5 // pred_region
      // Predicated region
      $region17: #{mois_sam2_mask_combine.1} parent=15 // pred_check
        %p132 = pneg %p29
      $region18: #{mois_sam2_mask_combine.1} parent=15 // pred_check_branch
        %134 = sbr.rel (%p132) target = $region20
      $region19: #{mois_sam2_mask_combine.1} parent=15 // pred_region
        %s135 = smul.u32 2, %s9
        %p136 = scmp.lt.s32.totalorder %s135, 3
        %s137 = scalar_select %p136, %s135, 3
        %s138 = smul.addr %s137, 16
        %s139 = smul.addr %s138, 8
        %s140 = scalar_lea.vmem %s0, %s139
        %s141 = smul.u32 2, %s9
      $region20: #{mois_sam2_mask_combine.1} parent=15 // pred_fallthru
        _
      // Predicated region
      $region21: #{mois_sam2_mask_combine.1} parent=15 // pred_check
        %p142 = pneg %p55
      $region22: #{mois_sam2_mask_combine.1} parent=15 // pred_check_branch
        %144 = sbr.rel (%p142) target = $region24
      $region23: #{mois_sam2_mask_combine.1} parent=15 // pred_region
        %s145 = smul.u32 2, %s9
        %p146 = scmp.lt.s32.totalorder %s145, 3
        %s147 = scalar_select %p146, %s145, 3
        %s148 = smul.addr %s147, 16
        %s149 = smul.addr %s148, 8
        %s150 = scalar_lea.vmem %s1, %s149
        %s151 = smul.u32 2, %s9
      $region24: #{mois_sam2_mask_combine.1} parent=15 // pred_fallthru
        _
      // Predicated region
      $region25: #{mois_sam2_mask_combine.1} parent=15 // pred_check
        %p152 = pneg %p81
      $region26: #{mois_sam2_mask_combine.1} parent=15 // pred_check_branch
        %154 = sbr.rel (%p152) target = $region28
      $region27: #{mois_sam2_mask_combine.1} parent=15 // pred_region
        %s155 = smul.u32 2, %s9
        %p156 = scmp.lt.s32.totalorder %s155, 3
        %s157 = scalar_select %p156, %s155, 3
        %s158 = smul.addr %s157, 16
        %s159 = smul.addr %s158, 8
        %s160 = scalar_lea.vmem %s2, %s159
        %s161 = smul.u32 2, %s9
      $region28: #{mois_sam2_mask_combine.1} parent=15 // pred_fallthru
        _
    $region16: #{mois_sam2_mask_combine.1} parent=5 // pred_fallthru
      _
    %p162 = scmp.le.s32.totalorder 1, %s9
    %p163 = scmp.lt.s32.totalorder %s9, 3
    %p164 = pnand %p162, %p163
    %p165 = pneg %p164
    // Predicated region
    $region29: #{mois_sam2_mask_combine.1} parent=5 // pred_check
      _
    $region30: #{mois_sam2_mask_combine.1} parent=5 // pred_check_branch
      %167 = sbr.rel (%p164) target = $region32
    $region31: #{mois_sam2_mask_combine.1} parent=5 // pred_region
      %s168 = ssub.s32 %s9, 1
      %s169 = smul.u32 2, %s14
      %p170 = scmp.lt.s32.totalorder %s169, 3
      %s171 = scalar_select %p170, %s169, 3
      %s172 = smul.addr %s171, 16
      %s173 = smul.addr %s172, 8
      %s174 = scalar_lea.vmem %s0, %s173
      %p175 = pneg %p35
      %p176 = pneg %p32
      %s177 = smul.u32 2, %s14
      %p178 = scmp.lt.s32.totalorder %s177, 3
      %s179 = scalar_select %p178, %s177, 3
      %s180 = smul.addr %s179, 16
      %s181 = smul.addr %s180, 8
      %s182 = scalar_lea.vmem %s1, %s181
      %p183 = pneg %p61
      %p184 = pneg %p58
      %s185 = smul.u32 2, %s14
      %p186 = scmp.lt.s32.totalorder %s185, 3
      %s187 = scalar_select %p186, %s185, 3
      %s188 = smul.addr %s187, 16
      %s189 = smul.addr %s188, 8
      %s190 = scalar_lea.vmem %s2, %s189
      %p191 = pneg %p87
      %p192 = pneg %p84
      %p193 = pneg %p113
      %p194 = pneg %p110
      %s195 = smul.u32 2, %s14
      %p196 = scmp.lt.s32.totalorder %s195, 3
      %s197 = scalar_select %p196, %s195, 3
      %s198 = smul.addr %s197, 16
      %s199 = smul.addr %s198, 8
      %s200 = scalar_lea.vmem %s3, %s199
      %s201 = smul.u32 2, %s14
      %p202 = scmp.lt.s32.totalorder %s201, 3
      %s203 = scalar_select %p202, %s201, 3
      %s204 = smul.addr %s203, 16
      %s205 = smul.addr %s204, 8
      %s206 = scalar_lea.vmem %s0, %s205
      %s207 = smul.u32 2, %s14
      %s208 = smul.u32 2, %s14
      %p209 = scmp.lt.s32.totalorder %s208, 3
      %s210 = scalar_select %p209, %s208, 3
      %s211 = smul.addr %s210, 16
      %s212 = smul.addr %s211, 8
      %s213 = scalar_lea.vmem %s1, %s212
      %s214 = smul.u32 2, %s14
      %s215 = smul.u32 2, %s14
      %p216 = scmp.lt.s32.totalorder %s215, 3
      %s217 = scalar_select %p216, %s215, 3
      %s218 = smul.addr %s217, 16
      %s219 = smul.addr %s218, 8
      %s220 = scalar_lea.vmem %s2, %s219
      %s221 = smul.u32 2, %s14
      %s222 = smul.u32 2, %s14
      %p223 = scmp.lt.s32.totalorder %s222, 3
      %s224 = scalar_select %p223, %s222, 3
      %s225 = smul.addr %s224, 16
      %s226 = smul.addr %s225, 8
      %s227 = scalar_lea.vmem %s3, %s226
      %s228 = smul.u32 2, %s14
      %v229 = vld [vmem:[%s206] sm:$0xff]
      %v230 = vld [vmem:[%s206 + $0x8] sm:$0xff]
      %v231 = vld [vmem:[%s206 + $0x10] sm:$0xff]
      %v232 = vld [vmem:[%s206 + $0x18] sm:$0xff]
      %v233 = vld [vmem:[%s206 + $0x20] sm:$0xff]
      %v234 = vld [vmem:[%s206 + $0x28] sm:$0xff]
      %v235 = vld [vmem:[%s206 + $0x30] sm:$0xff]
      %v236 = vld [vmem:[%s206 + $0x38] sm:$0xff]
      %v237 = vld [vmem:[%s206 + $0x40] sm:$0xff]
      %v238 = vld [vmem:[%s206 + $0x48] sm:$0xff]
      %v239 = vld [vmem:[%s206 + $0x50] sm:$0xff]
      %v240 = vld [vmem:[%s206 + $0x58] sm:$0xff]
      %v241 = vld [vmem:[%s206 + $0x60] sm:$0xff]
      %v242 = vld [vmem:[%s206 + $0x68] sm:$0xff]
      %v243 = vld [vmem:[%s206 + $0x70] sm:$0xff]
      %v244 = vld [vmem:[%s206 + $0x78] sm:$0xff]
      %v245 = vld [vmem:[%s206 + $0x80] sm:$0xff]
      %v246 = vld [vmem:[%s206 + $0x88] sm:$0xff]
      %v247 = vld [vmem:[%s206 + $0x90] sm:$0xff]
      %v248 = vld [vmem:[%s206 + $0x98] sm:$0xff]
      %v249 = vld [vmem:[%s206 + $0xa0] sm:$0xff]
      %v250 = vld [vmem:[%s206 + $0xa8] sm:$0xff]
      %v251 = vld [vmem:[%s206 + $0xb0] sm:$0xff]
      %v252 = vld [vmem:[%s206 + $0xb8] sm:$0xff]
      %v253 = vld [vmem:[%s206 + $0xc0] sm:$0xff]
      %v254 = vld [vmem:[%s206 + $0xc8] sm:$0xff]
      %v255 = vld [vmem:[%s206 + $0xd0] sm:$0xff]
      %v256 = vld [vmem:[%s206 + $0xd8] sm:$0xff]
      %v257 = vld [vmem:[%s206 + $0xe0] sm:$0xff]
      %v258 = vld [vmem:[%s206 + $0xe8] sm:$0xff]
      %v259 = vld [vmem:[%s206 + $0xf0] sm:$0xff]
      %v260 = vld [vmem:[%s206 + $0xf8] sm:$0xff]
      %vm261 = vcmp.gt.f32.partialorder %v229, 0.0
      %vm262 = vcmp.gt.f32.partialorder %v230, 0.0
      %vm263 = vcmp.gt.f32.partialorder %v231, 0.0
      %vm264 = vcmp.gt.f32.partialorder %v232, 0.0
      %vm265 = vcmp.gt.f32.partialorder %v233, 0.0
      %vm266 = vcmp.gt.f32.partialorder %v234, 0.0
      %vm267 = vcmp.gt.f32.partialorder %v235, 0.0
      %vm268 = vcmp.gt.f32.partialorder %v236, 0.0
      %vm269 = vcmp.gt.f32.partialorder %v237, 0.0
      %vm270 = vcmp.gt.f32.partialorder %v238, 0.0
      %vm271 = vcmp.gt.f32.partialorder %v239, 0.0
      %vm272 = vcmp.gt.f32.partialorder %v240, 0.0
      %vm273 = vcmp.gt.f32.partialorder %v241, 0.0
      %vm274 = vcmp.gt.f32.partialorder %v242, 0.0
      %vm275 = vcmp.gt.f32.partialorder %v243, 0.0
      %vm276 = vcmp.gt.f32.partialorder %v244, 0.0
      %vm277 = vcmp.gt.f32.partialorder %v245, 0.0
      %vm278 = vcmp.gt.f32.partialorder %v246, 0.0
      %vm279 = vcmp.gt.f32.partialorder %v247, 0.0
      %vm280 = vcmp.gt.f32.partialorder %v248, 0.0
      %vm281 = vcmp.gt.f32.partialorder %v249, 0.0
      %vm282 = vcmp.gt.f32.partialorder %v250, 0.0
      %vm283 = vcmp.gt.f32.partialorder %v251, 0.0
      %vm284 = vcmp.gt.f32.partialorder %v252, 0.0
      %vm285 = vcmp.gt.f32.partialorder %v253, 0.0
      %vm286 = vcmp.gt.f32.partialorder %v254, 0.0
      %vm287 = vcmp.gt.f32.partialorder %v255, 0.0
      %vm288 = vcmp.gt.f32.partialorder %v256, 0.0
      %vm289 = vcmp.gt.f32.partialorder %v257, 0.0
      %vm290 = vcmp.gt.f32.partialorder %v258, 0.0
      %vm291 = vcmp.gt.f32.partialorder %v259, 0.0
      %vm292 = vcmp.gt.f32.partialorder %v260, 0.0
      %v293 = vld [vmem:[%s213] sm:$0xff]
      %v294 = vld [vmem:[%s213 + $0x8] sm:$0xff]
      %v295 = vld [vmem:[%s213 + $0x10] sm:$0xff]
      %v296 = vld [vmem:[%s213 + $0x18] sm:$0xff]
      %v297 = vld [vmem:[%s213 + $0x20] sm:$0xff]
      %v298 = vld [vmem:[%s213 + $0x28] sm:$0xff]
      %v299 = vld [vmem:[%s213 + $0x30] sm:$0xff]
      %v300 = vld [vmem:[%s213 + $0x38] sm:$0xff]
      %v301 = vld [vmem:[%s213 + $0x40] sm:$0xff]
      %v302 = vld [vmem:[%s213 + $0x48] sm:$0xff]
      %v303 = vld [vmem:[%s213 + $0x50] sm:$0xff]
      %v304 = vld [vmem:[%s213 + $0x58] sm:$0xff]
      %v305 = vld [vmem:[%s213 + $0x60] sm:$0xff]
      %v306 = vld [vmem:[%s213 + $0x68] sm:$0xff]
      %v307 = vld [vmem:[%s213 + $0x70] sm:$0xff]
      %v308 = vld [vmem:[%s213 + $0x78] sm:$0xff]
      %v309 = vld [vmem:[%s213 + $0x80] sm:$0xff]
      %v310 = vld [vmem:[%s213 + $0x88] sm:$0xff]
      %v311 = vld [vmem:[%s213 + $0x90] sm:$0xff]
      %v312 = vld [vmem:[%s213 + $0x98] sm:$0xff]
      %v313 = vld [vmem:[%s213 + $0xa0] sm:$0xff]
      %v314 = vld [vmem:[%s213 + $0xa8] sm:$0xff]
      %v315 = vld [vmem:[%s213 + $0xb0] sm:$0xff]
      %v316 = vld [vmem:[%s213 + $0xb8] sm:$0xff]
      %v317 = vld [vmem:[%s213 + $0xc0] sm:$0xff]
      %v318 = vld [vmem:[%s213 + $0xc8] sm:$0xff]
      %v319 = vld [vmem:[%s213 + $0xd0] sm:$0xff]
      %v320 = vld [vmem:[%s213 + $0xd8] sm:$0xff]
      %v321 = vld [vmem:[%s213 + $0xe0] sm:$0xff]
      %v322 = vld [vmem:[%s213 + $0xe8] sm:$0xff]
      %v323 = vld [vmem:[%s213 + $0xf0] sm:$0xff]
      %v324 = vld [vmem:[%s213 + $0xf8] sm:$0xff]
      %vm325 = vcmp.gt.f32.partialorder %v293, 0.0
      %vm326 = vcmp.gt.f32.partialorder %v294, 0.0
      %vm327 = vcmp.gt.f32.partialorder %v295, 0.0
      %vm328 = vcmp.gt.f32.partialorder %v296, 0.0
      %vm329 = vcmp.gt.f32.partialorder %v297, 0.0
      %vm330 = vcmp.gt.f32.partialorder %v298, 0.0
      %vm331 = vcmp.gt.f32.partialorder %v299, 0.0
      %vm332 = vcmp.gt.f32.partialorder %v300, 0.0
      %vm333 = vcmp.gt.f32.partialorder %v301, 0.0
      %vm334 = vcmp.gt.f32.partialorder %v302, 0.0
      %vm335 = vcmp.gt.f32.partialorder %v303, 0.0
      %vm336 = vcmp.gt.f32.partialorder %v304, 0.0
      %vm337 = vcmp.gt.f32.partialorder %v305, 0.0
      %vm338 = vcmp.gt.f32.partialorder %v306, 0.0
      %vm339 = vcmp.gt.f32.partialorder %v307, 0.0
      %vm340 = vcmp.gt.f32.partialorder %v308, 0.0
      %vm341 = vcmp.gt.f32.partialorder %v309, 0.0
      %vm342 = vcmp.gt.f32.partialorder %v310, 0.0
      %vm343 = vcmp.gt.f32.partialorder %v311, 0.0
      %vm344 = vcmp.gt.f32.partialorder %v312, 0.0
      %vm345 = vcmp.gt.f32.partialorder %v313, 0.0
      %vm346 = vcmp.gt.f32.partialorder %v314, 0.0
      %vm347 = vcmp.gt.f32.partialorder %v315, 0.0
      %vm348 = vcmp.gt.f32.partialorder %v316, 0.0
      %vm349 = vcmp.gt.f32.partialorder %v317, 0.0
      %vm350 = vcmp.gt.f32.partialorder %v318, 0.0
      %vm351 = vcmp.gt.f32.partialorder %v319, 0.0
      %vm352 = vcmp.gt.f32.partialorder %v320, 0.0
      %vm353 = vcmp.gt.f32.partialorder %v321, 0.0
      %vm354 = vcmp.gt.f32.partialorder %v322, 0.0
      %vm355 = vcmp.gt.f32.partialorder %v323, 0.0
      %vm356 = vcmp.gt.f32.partialorder %v324, 0.0
      %vm357 = vmor %vm261, %vm325
      %vm358 = vmor %vm262, %vm326
      %vm359 = vmor %vm263, %vm327
      %vm360 = vmor %vm264, %vm328
      %vm361 = vmor %vm265, %vm329
      %vm362 = vmor %vm266, %vm330
      %vm363 = vmor %vm267, %vm331
      %vm364 = vmor %vm268, %vm332
      %vm365 = vmor %vm269, %vm333
      %vm366 = vmor %vm270, %vm334
      %vm367 = vmor %vm271, %vm335
      %vm368 = vmor %vm272, %vm336
      %vm369 = vmor %vm273, %vm337
      %vm370 = vmor %vm274, %vm338
      %vm371 = vmor %vm275, %vm339
      %vm372 = vmor %vm276, %vm340
      %vm373 = vmor %vm277, %vm341
      %vm374 = vmor %vm278, %vm342
      %vm375 = vmor %vm279, %vm343
      %vm376 = vmor %vm280, %vm344
      %vm377 = vmor %vm281, %vm345
      %vm378 = vmor %vm282, %vm346
      %vm379 = vmor %vm283, %vm347
      %vm380 = vmor %vm284, %vm348
      %vm381 = vmor %vm285, %vm349
      %vm382 = vmor %vm286, %vm350
      %vm383 = vmor %vm287, %vm351
      %vm384 = vmor %vm288, %vm352
      %vm385 = vmor %vm289, %vm353
      %vm386 = vmor %vm290, %vm354
      %vm387 = vmor %vm291, %vm355
      %vm388 = vmor %vm292, %vm356
      %v389 = vld [vmem:[%s220] sm:$0xff]
      %v390 = vld [vmem:[%s220 + $0x8] sm:$0xff]
      %v391 = vld [vmem:[%s220 + $0x10] sm:$0xff]
      %v392 = vld [vmem:[%s220 + $0x18] sm:$0xff]
      %v393 = vld [vmem:[%s220 + $0x20] sm:$0xff]
      %v394 = vld [vmem:[%s220 + $0x28] sm:$0xff]
      %v395 = vld [vmem:[%s220 + $0x30] sm:$0xff]
      %v396 = vld [vmem:[%s220 + $0x38] sm:$0xff]
      %v397 = vld [vmem:[%s220 + $0x40] sm:$0xff]
      %v398 = vld [vmem:[%s220 + $0x48] sm:$0xff]
      %v399 = vld [vmem:[%s220 + $0x50] sm:$0xff]
      %v400 = vld [vmem:[%s220 + $0x58] sm:$0xff]
      %v401 = vld [vmem:[%s220 + $0x60] sm:$0xff]
      %v402 = vld [vmem:[%s220 + $0x68] sm:$0xff]
      %v403 = vld [vmem:[%s220 + $0x70] sm:$0xff]
      %v404 = vld [vmem:[%s220 + $0x78] sm:$0xff]
      %v405 = vld [vmem:[%s220 + $0x80] sm:$0xff]
      %v406 = vld [vmem:[%s220 + $0x88] sm:$0xff]
      %v407 = vld [vmem:[%s220 + $0x90] sm:$0xff]
      %v408 = vld [vmem:[%s220 + $0x98] sm:$0xff]
      %v409 = vld [vmem:[%s220 + $0xa0] sm:$0xff]
      %v410 = vld [vmem:[%s220 + $0xa8] sm:$0xff]
      %v411 = vld [vmem:[%s220 + $0xb0] sm:$0xff]
      %v412 = vld [vmem:[%s220 + $0xb8] sm:$0xff]
      %v413 = vld [vmem:[%s220 + $0xc0] sm:$0xff]
      %v414 = vld [vmem:[%s220 + $0xc8] sm:$0xff]
      %v415 = vld [vmem:[%s220 + $0xd0] sm:$0xff]
      %v416 = vld [vmem:[%s220 + $0xd8] sm:$0xff]
      %v417 = vld [vmem:[%s220 + $0xe0] sm:$0xff]
      %v418 = vld [vmem:[%s220 + $0xe8] sm:$0xff]
      %v419 = vld [vmem:[%s220 + $0xf0] sm:$0xff]
      %v420 = vld [vmem:[%s220 + $0xf8] sm:$0xff]
      %vm421 = vcmp.gt.f32.partialorder %v389, 0.0
      %vm422 = vcmp.gt.f32.partialorder %v390, 0.0
      %vm423 = vcmp.gt.f32.partialorder %v391, 0.0
      %vm424 = vcmp.gt.f32.partialorder %v392, 0.0
      %vm425 = vcmp.gt.f32.partialorder %v393, 0.0
      %vm426 = vcmp.gt.f32.partialorder %v394, 0.0
      %vm427 = vcmp.gt.f32.partialorder %v395, 0.0
      %vm428 = vcmp.gt.f32.partialorder %v396, 0.0
      %vm429 = vcmp.gt.f32.partialorder %v397, 0.0
      %vm430 = vcmp.gt.f32.partialorder %v398, 0.0
      %vm431 = vcmp.gt.f32.partialorder %v399, 0.0
      %vm432 = vcmp.gt.f32.partialorder %v400, 0.0
      %vm433 = vcmp.gt.f32.partialorder %v401, 0.0
      %vm434 = vcmp.gt.f32.partialorder %v402, 0.0
      %vm435 = vcmp.gt.f32.partialorder %v403, 0.0
      %vm436 = vcmp.gt.f32.partialorder %v404, 0.0
      %vm437 = vcmp.gt.f32.partialorder %v405, 0.0
      %vm438 = vcmp.gt.f32.partialorder %v406, 0.0
      %vm439 = vcmp.gt.f32.partialorder %v407, 0.0
      %vm440 = vcmp.gt.f32.partialorder %v408, 0.0
      %vm441 = vcmp.gt.f32.partialorder %v409, 0.0
      %vm442 = vcmp.gt.f32.partialorder %v410, 0.0
      %vm443 = vcmp.gt.f32.partialorder %v411, 0.0
      %vm444 = vcmp.gt.f32.partialorder %v412, 0.0
      %vm445 = vcmp.gt.f32.partialorder %v413, 0.0
      %vm446 = vcmp.gt.f32.partialorder %v414, 0.0
      %vm447 = vcmp.gt.f32.partialorder %v415, 0.0
      %vm448 = vcmp.gt.f32.partialorder %v416, 0.0
      %vm449 = vcmp.gt.f32.partialorder %v417, 0.0
      %vm450 = vcmp.gt.f32.partialorder %v418, 0.0
      %vm451 = vcmp.gt.f32.partialorder %v419, 0.0
      %vm452 = vcmp.gt.f32.partialorder %v420, 0.0
      %vm453 = vmor %vm357, %vm421
      %vm454 = vmor %vm358, %vm422
      %vm455 = vmor %vm359, %vm423
      %vm456 = vmor %vm360, %vm424
      %vm457 = vmor %vm361, %vm425
      %vm458 = vmor %vm362, %vm426
      %vm459 = vmor %vm363, %vm427
      %vm460 = vmor %vm364, %vm428
      %vm461 = vmor %vm365, %vm429
      %vm462 = vmor %vm366, %vm430
      %vm463 = vmor %vm367, %vm431
      %vm464 = vmor %vm368, %vm432
      %vm465 = vmor %vm369, %vm433
      %vm466 = vmor %vm370, %vm434
      %vm467 = vmor %vm371, %vm435
      %vm468 = vmor %vm372, %vm436
      %vm469 = vmor %vm373, %vm437
      %vm470 = vmor %vm374, %vm438
      %vm471 = vmor %vm375, %vm439
      %vm472 = vmor %vm376, %vm440
      %vm473 = vmor %vm377, %vm441
      %vm474 = vmor %vm378, %vm442
      %vm475 = vmor %vm379, %vm443
      %vm476 = vmor %vm380, %vm444
      %vm477 = vmor %vm381, %vm445
      %vm478 = vmor %vm382, %vm446
      %vm479 = vmor %vm383, %vm447
      %vm480 = vmor %vm384, %vm448
      %vm481 = vmor %vm385, %vm449
      %vm482 = vmor %vm386, %vm450
      %vm483 = vmor %vm387, %vm451
      %vm484 = vmor %vm388, %vm452
      %v485 = vsel %vm453, 1, 0
      %v486 = vsel %vm454, 1, 0
      %v487 = vsel %vm455, 1, 0
      %v488 = vsel %vm456, 1, 0
      %v489 = vsel %vm457, 1, 0
      %v490 = vsel %vm458, 1, 0
      %v491 = vsel %vm459, 1, 0
      %v492 = vsel %vm460, 1, 0
      %v493 = vsel %vm461, 1, 0
      %v494 = vsel %vm462, 1, 0
      %v495 = vsel %vm463, 1, 0
      %v496 = vsel %vm464, 1, 0
      %v497 = vsel %vm465, 1, 0
      %v498 = vsel %vm466, 1, 0
      %v499 = vsel %vm467, 1, 0
      %v500 = vsel %vm468, 1, 0
      %v501 = vsel %vm469, 1, 0
      %v502 = vsel %vm470, 1, 0
      %v503 = vsel %vm471, 1, 0
      %v504 = vsel %vm472, 1, 0
      %v505 = vsel %vm473, 1, 0
      %v506 = vsel %vm474, 1, 0
      %v507 = vsel %vm475, 1, 0
      %v508 = vsel %vm476, 1, 0
      %v509 = vsel %vm477, 1, 0
      %v510 = vsel %vm478, 1, 0
      %v511 = vsel %vm479, 1, 0
      %v512 = vsel %vm480, 1, 0
      %v513 = vsel %vm481, 1, 0
      %v514 = vsel %vm482, 1, 0
      %v515 = vsel %vm483, 1, 0
      %v516 = vsel %vm484, 1, 0
      %v517 = vcvt.s32.f32 %v485
      %v518 = vcvt.s32.f32 %v486
      %v519 = vcvt.s32.f32 %v487
      %v520 = vcvt.s32.f32 %v488
      %v521 = vcvt.s32.f32 %v489
      %v522 = vcvt.s32.f32 %v490
      %v523 = vcvt.s32.f32 %v491
      %v524 = vcvt.s32.f32 %v492
      %v525 = vcvt.s32.f32 %v493
      %v526 = vcvt.s32.f32 %v494
      %v527 = vcvt.s32.f32 %v495
      %v528 = vcvt.s32.f32 %v496
      %v529 = vcvt.s32.f32 %v497
      %v530 = vcvt.s32.f32 %v498
      %v531 = vcvt.s32.f32 %v499
      %v532 = vcvt.s32.f32 %v500
      %v533 = vcvt.s32.f32 %v501
      %v534 = vcvt.s32.f32 %v502
      %v535 = vcvt.s32.f32 %v503
      %v536 = vcvt.s32.f32 %v504
      %v537 = vcvt.s32.f32 %v505
      %v538 = vcvt.s32.f32 %v506
      %v539 = vcvt.s32.f32 %v507
      %v540 = vcvt.s32.f32 %v508
      %v541 = vcvt.s32.f32 %v509
      %v542 = vcvt.s32.f32 %v510
      %v543 = vcvt.s32.f32 %v511
      %v544 = vcvt.s32.f32 %v512
      %v545 = vcvt.s32.f32 %v513
      %v546 = vcvt.s32.f32 %v514
      %v547 = vcvt.s32.f32 %v515
      %v548 = vcvt.s32.f32 %v516
      %549 = vst [vmem:[%s227] sm:$0xff] %v517
      %550 = vst [vmem:[%s227 + $0x8] sm:$0xff] %v518
      %551 = vst [vmem:[%s227 + $0x10] sm:$0xff] %v519
      %552 = vst [vmem:[%s227 + $0x18] sm:$0xff] %v520
      %553 = vst [vmem:[%s227 + $0x20] sm:$0xff] %v521
      %554 = vst [vmem:[%s227 + $0x28] sm:$0xff] %v522
      %555 = vst [vmem:[%s227 + $0x30] sm:$0xff] %v523
      %556 = vst [vmem:[%s227 + $0x38] sm:$0xff] %v524
      %557 = vst [vmem:[%s227 + $0x40] sm:$0xff] %v525
      %558 = vst [vmem:[%s227 + $0x48] sm:$0xff] %v526
      %559 = vst [vmem:[%s227 + $0x50] sm:$0xff] %v527
      %560 = vst [vmem:[%s227 + $0x58] sm:$0xff] %v528
      %561 = vst [vmem:[%s227 + $0x60] sm:$0xff] %v529
      %562 = vst [vmem:[%s227 + $0x68] sm:$0xff] %v530
      %563 = vst [vmem:[%s227 + $0x70] sm:$0xff] %v531
      %564 = vst [vmem:[%s227 + $0x78] sm:$0xff] %v532
      %565 = vst [vmem:[%s227 + $0x80] sm:$0xff] %v533
      %566 = vst [vmem:[%s227 + $0x88] sm:$0xff] %v534
      %567 = vst [vmem:[%s227 + $0x90] sm:$0xff] %v535
      %568 = vst [vmem:[%s227 + $0x98] sm:$0xff] %v536
      %569 = vst [vmem:[%s227 + $0xa0] sm:$0xff] %v537
      %570 = vst [vmem:[%s227 + $0xa8] sm:$0xff] %v538
      %571 = vst [vmem:[%s227 + $0xb0] sm:$0xff] %v539
      %572 = vst [vmem:[%s227 + $0xb8] sm:$0xff] %v540
      %573 = vst [vmem:[%s227 + $0xc0] sm:$0xff] %v541
      %574 = vst [vmem:[%s227 + $0xc8] sm:$0xff] %v542
      %575 = vst [vmem:[%s227 + $0xd0] sm:$0xff] %v543
      %576 = vst [vmem:[%s227 + $0xd8] sm:$0xff] %v544
      %577 = vst [vmem:[%s227 + $0xe0] sm:$0xff] %v545
      %578 = vst [vmem:[%s227 + $0xe8] sm:$0xff] %v546
      %579 = vst [vmem:[%s227 + $0xf0] sm:$0xff] %v547
      %580 = vst [vmem:[%s227 + $0xf8] sm:$0xff] %v548
      %s581 = smul.u32 2, %s14
      %p582 = scmp.lt.s32.totalorder %s581, 3
      %s583 = scalar_select %p582, %s581, 3
      %s584 = smul.addr %s583, 16
      %s585 = smul.addr %s584, 8
      %s586 = scalar_lea.vmem %s3, %s585
      // Predicated region
      $region33: #{mois_sam2_mask_combine.1} parent=31 // pred_check
        %p587 = pneg %p110
      $region34: #{mois_sam2_mask_combine.1} parent=31 // pred_check_branch
        %589 = sbr.rel (%p587) target = $region36
      $region35: #{mois_sam2_mask_combine.1} parent=31 // pred_region
        %s590 = smul.u32 2, %s14
      $region36: #{mois_sam2_mask_combine.1} parent=31 // pred_fallthru
        _
    $region32: #{mois_sam2_mask_combine.1} parent=5 // pred_fallthru
      _
    %p591 = scmp.le.s32.totalorder 2, %s9
    // Predicated region
    $region37: #{mois_sam2_mask_combine.1} parent=5 // pred_check
      %p592 = pneg %p591
    $region38: #{mois_sam2_mask_combine.1} parent=5 // pred_check_branch
      %594 = sbr.rel (%p592) target = $region40
    $region39: #{mois_sam2_mask_combine.1} parent=5 // pred_region
      %s595 = ssub.s32 %s9, 2
      // Predicated region
      $region41: #{mois_sam2_mask_combine.1} parent=39 // pred_check
        %p596 = pneg %p116
      $region42: #{mois_sam2_mask_combine.1} parent=39 // pred_check_branch
        %598 = sbr.rel (%p596) target = $region44
      $region43: #{mois_sam2_mask_combine.1} parent=39 // pred_region
        %s599 = smul.u32 2, %s15
        %p600 = scmp.lt.s32.totalorder %s599, 3
        %s601 = scalar_select %p600, %s599, 3
        %s602 = smul.addr %s601, 16
        %s603 = smul.addr %s602, 8
        %s604 = scalar_lea.vmem %s3, %s603
      $region44: #{mois_sam2_mask_combine.1} parent=39 // pred_fallthru
        _
    $region40: #{mois_sam2_mask_combine.1} parent=5 // pred_fallthru
      _
  $region6: #{mois_sam2_mask_combine.1} parent=0 // loop_footer
    %s13 = sadd.s32 1, %s9
  $region7: #{mois_sam2_mask_combine.1} parent=0 // loop_footer_branch
    %8 = sbr.rel target = $region3
  $region8: #{mois_sam2_mask_combine.1} parent=0 // loop_exit
    _

</llo_original>
